<compile_context>
chip_gen: v5e
topology: v5e:2x2
jax: 0.10.0
libtpu: 0.0.40
codegen_flags: <defaults>
</compile_context>

<pallas_src>
import functools
import math

import jax
import jax.numpy as jnp
from jax import lax
from jax.experimental import pallas as pl
from jax.experimental.pallas import tpu as pltpu


# ----------------------------------------------------------------------------
# Per-generation VMEM budget (v5e/v6e: 128 MiB physical, v7x: 64 MiB).
# ----------------------------------------------------------------------------
def _vmem_limit_bytes():
    try:
        info = pltpu.get_tpu_info()
        cap = getattr(info, "vmem_capacity_bytes", None)
        if cap:
            return int(min(cap * 3 // 4, 100 * 1024 * 1024))
    except Exception:
        pass
    return 48 * 1024 * 1024  # conservative: safe on every generation


_VMEM_LIMIT = _vmem_limit_bytes()


# ----------------------------------------------------------------------------
# Linear projection:  y = x @ W^T + b    (tiled over rows, d_out and d_in)
# ----------------------------------------------------------------------------
def _linear_kernel(x_ref, w_ref, b_ref, o_ref, acc_ref, *, matmul_dtype):
    k = pl.program_id(2)

    @pl.when(k == 0)
    def _init():
        acc_ref[...] = jnp.zeros_like(acc_ref)

    x = x_ref[...].astype(matmul_dtype)              # (TM, TK)
    # Contract last dim of x against last dim of w (nn.Linear stores (d_out, d_in)):
    # no in-kernel transpose needed.
    acc_ref[...] += lax.dot_general(
        x, w_ref[...],
        dimension_numbers=(((1,), (1,)), ((), ())),
        preferred_element_type=jnp.float32)          # (TM, TN)

    @pl.when(k == pl.num_programs(2) - 1)
    def _finalize():
        o_ref[...] = (acc_ref[...] + b_ref[...].astype(jnp.float32)).astype(o_ref.dtype)


def linear(x, w, b, *, matmul_dtype=jnp.bfloat16, out_dtype=jnp.float32,
           tm=256, tn=512, tk=1024):
    """x: (N, D_in), w: (D_out, D_in), b: (D_out,) -> (N, D_out) in out_dtype."""
    N, d_in = x.shape
    d_out = w.shape[0]
    TM = N if N <= tm else tm            # tm multiple of 8
    TN = d_out if d_out <= tn else tn    # tn multiple of 128
    TK = d_in if d_in <= tk else tk      # tk multiple of 128

    w = w.astype(matmul_dtype)           # one host-side cast (not per grid step)
    b2 = b.reshape(1, d_out).astype(jnp.float32)

    kernel = functools.partial(_linear_kernel, matmul_dtype=matmul_dtype)
    return pl.pallas_call(
        kernel,
        out_shape=jax.ShapeDtypeStruct((N, d_out), out_dtype),
        grid=(pl.cdiv(N, TM), pl.cdiv(d_out, TN), pl.cdiv(d_in, TK)),
        in_specs=[
            pl.BlockSpec((TM, TK), lambda i, j, k: (i, k)),
            pl.BlockSpec((TN, TK), lambda i, j, k: (j, k)),
            pl.BlockSpec((1, TN), lambda i, j, k: (0, j)),
        ],
        out_specs=pl.BlockSpec((TM, TN), lambda i, j, k: (i, j)),
        scratch_shapes=[pltpu.VMEM((TM, TN), jnp.float32)],
        compiler_params=pltpu.CompilerParams(
            dimension_semantics=("parallel", "parallel", "arbitrary"),
            vmem_limit_bytes=_VMEM_LIMIT),
    )(x, w, b2)


# ----------------------------------------------------------------------------
# Scaled dot-product attention.
#   One grid step = (batch b, head-group g, q-tile q):
#     q_ref:    (TQ, HG, d_k)   -- already scaled by 1/sqrt(d_k) (folded into W_Q)
#     k_ref:    (S,  HG, d_k)   -- resident across q steps
#     v_ref:    (S,  HG, d_k)   -- resident across q steps
#     attn_ref: (HG, TQ, S)     -- per-head rows written directly (no stack)
#     ctx_ref:  (TQ, HG*d_k)    -- lane-dense slab of the merged-head output
# ----------------------------------------------------------------------------
def _attn_kernel(q_ref, k_ref, v_ref, attn_ref, ctx_ref):
    HG, d_k = q_ref.shape[1], q_ref.shape[2]
    for h in range(HG):                               # static unroll over heads in the group
        q = q_ref[:, h, :]                            # (TQ, d_k)
        k = k_ref[:, h, :]                            # (S,  d_k)
        s = lax.dot_general(
            q, k, dimension_numbers=(((1,), (1,)), ((), ())),
            preferred_element_type=jnp.float32)       # (TQ, S)
        m = jnp.max(s, axis=-1, keepdims=True)
        e = jnp.exp(s - m)
        inv = 1.0 / jnp.sum(e, axis=-1, keepdims=True)  # exact: attn rows sum to 1
        p = e * inv
        attn_ref[h, :, :] = p.astype(attn_ref.dtype)
        v = v_ref[:, h, :]                            # (S, d_k)
        c = jnp.dot(p.astype(v.dtype), v, preferred_element_type=jnp.float32)
        ctx_ref[:, h * d_k:(h + 1) * d_k] = c.astype(ctx_ref.dtype)


def _attn_tiles(S, H, d_k, io_bytes, attn_bytes, ctx_bytes, vmem_limit):
    """Pick (heads-per-step, q-tile) so the double-buffered footprint fits VMEM."""
    # Head groups of 8 keep the (HG, d_k) trailing block dims layout-legal.
    if H > 8 and H % 8 == 0 and (8 * d_k) % 128 == 0:
        HG = 8
    else:
        HG = H
    budget = int(vmem_limit * 0.85)
    kv = 2 * 2 * S * HG * d_k * io_bytes                  # K + V, double-buffered

    def footprint(tq):
        per_step = (tq * HG * d_k * io_bytes              # q block
                    + HG * tq * S * attn_bytes            # attn block (dominant)
                    + tq * HG * d_k * ctx_bytes)          # ctx block
        return kv + 2 * per_step                          # double-buffered

    TQ = S if S <= 256 else 256
    while TQ > 8 and footprint(TQ) > budget:
        TQ = max(8, ((TQ // 2) + 7) // 8 * 8)             # keep multiple of 8
    return HG, TQ


def _sdpa_call(arrays, in_specs, B, S, H, d_k, HG, TQ, attn_dtype, ctx_dtype):
    D = H * d_k
    out_shape = (
        jax.ShapeDtypeStruct((B, H, S, S), attn_dtype),   # torch layout
        jax.ShapeDtypeStruct((B, S, D), ctx_dtype),       # merged heads, lane-dense
    )
    out_specs = (
        pl.BlockSpec((None, HG, TQ, S), lambda b, g, q: (b, g, q, 0)),
        pl.BlockSpec((None, TQ, HG * d_k), lambda b, g, q: (b, q, g)),
    )
    return pl.pallas_call(
        _attn_kernel,
        out_shape=out_shape,
        grid=(B, pl.cdiv(H, HG), pl.cdiv(S, TQ)),
        in_specs=in_specs,
        out_specs=out_specs,
        compiler_params=pltpu.CompilerParams(
            dimension_semantics=("parallel", "parallel", "parallel"),
            vmem_limit_bytes=_VMEM_LIMIT),
    )(*arrays)


def sdpa(Q, K, V, *, attn_dtype=jnp.float32, ctx_dtype=None):
    """Q, K, V: (B, S, H, d_k) -> (attn (B,H,S,S), ctx (B,S,H*d_k))."""
    B, S, H, d_k = Q.shape
    if ctx_dtype is None:
        ctx_dtype = Q.dtype
    HG, TQ = _attn_tiles(S, H, d_k, jnp.dtype(Q.dtype).itemsize,
                         jnp.dtype(attn_dtype).itemsize,
                         jnp.dtype(ctx_dtype).itemsize, _VMEM_LIMIT)
    q_spec = pl.BlockSpec((None, TQ, HG, d_k), lambda b, g, q: (b, q, g, 0))
    kv_spec = pl.BlockSpec((None, S, HG, d_k), lambda b, g, q: (b, 0, g, 0))
    return _sdpa_call((Q, K, V), [q_spec, kv_spec, kv_spec],
                      B, S, H, d_k, HG, TQ, attn_dtype, ctx_dtype)


def sdpa_fused(qkv, *, attn_dtype=jnp.float32, ctx_dtype=None):
    """qkv: (B, S, 3, H, d_k) fused projection output (self-attention path).
    Q/K/V are carved out purely via BlockSpec index_maps (no slicing copies)."""
    B, S, _, H, d_k = qkv.shape
    if ctx_dtype is None:
        ctx_dtype = qkv.dtype
    HG, TQ = _attn_tiles(S, H, d_k, jnp.dtype(qkv.dtype).itemsize,
                         jnp.dtype(attn_dtype).itemsize,
                         jnp.dtype(ctx_dtype).itemsize, _VMEM_LIMIT)
    q_spec = pl.BlockSpec((None, TQ, None, HG, d_k), lambda b, g, q: (b, q, 0, g, 0))
    k_spec = pl.BlockSpec((None, S, None, HG, d_k), lambda b, g, q: (b, 0, 1, g, 0))
    v_spec = pl.BlockSpec((None, S, None, HG, d_k), lambda b, g, q: (b, 0, 2, g, 0))
    return _sdpa_call((qkv, qkv, qkv), [q_spec, k_spec, v_spec],
                      B, S, H, d_k, HG, TQ, attn_dtype, ctx_dtype)


# ----------------------------------------------------------------------------
# Full MultiHeadAttention forward
# ----------------------------------------------------------------------------
def multi_head_attention(query, key, value, params, num_heads,
                         matmul_dtype=jnp.bfloat16, attn_dtype=jnp.float32):
    B, S, D = query.shape
    H = num_heads
    d_k = D // H
    scale = 1.0 / math.sqrt(d_k)
    act_dtype = jnp.dtype(matmul_dtype)     # dtype of HBM intermediates (QKV / ctx)

    if (query is key) and (key is value):
        # Self-attention: fused QKV projection (single read of the activation).
        # 1/sqrt(d_k) folded into the Q rows of the fused weight/bias (host op).
        w_qkv = jnp.concatenate(
            [params["wq"] * scale, params["wk"], params["wv"]], axis=0)
        b_qkv = jnp.concatenate(
            [params["bq"] * scale, params["bk"], params["bv"]], axis=0)
        qkv = linear(query.reshape(B * S, D), w_qkv, b_qkv,
                     matmul_dtype=matmul_dtype, out_dtype=act_dtype)
        qkv = qkv.reshape(B, S, 3, H, d_k)               # free row-major reshape
        attn, ctx = sdpa_fused(qkv, attn_dtype=attn_dtype)
    else:
        def project(x, w, b):
            y = linear(x.reshape(B * S, D), w, b,
                       matmul_dtype=matmul_dtype, out_dtype=act_dtype)
            return y.reshape(B, S, H, d_k)               # free reshape, no transpose
        Q = project(query, params["wq"] * scale, params["bq"] * scale)
        K = project(key, params["wk"], params["bk"])
        V = project(value, params["wv"], params["bv"])
        attn, ctx = sdpa(Q, K, V, attn_dtype=attn_dtype)

    # ctx is already (B, S, D); flatten is free and the out-proj consumes it directly.
    out = linear(ctx.reshape(B * S, D), params["wo"], params["bo"],
                 matmul_dtype=matmul_dtype, out_dtype=jnp.float32)
    return out.reshape(B, S, D), attn


# ----------------------------------------------------------------------------
# Pure-JAX reference (high precision) for verification
# ----------------------------------------------------------------------------
def reference(query, key, value, params, num_heads):
    B, S, D = query.shape
    d_k = D // num_heads
    hp = lax.Precision.HIGHEST

    def lin(x, w, b):
        return jnp.einsum("bsd,od->bso", x, w, precision=hp) + b

    def split(x):
        return jnp.transpose(x.reshape(B, S, num_heads, d_k), (0, 2, 1, 3))

    Q = split(lin(query, params["wq"], params["bq"]))
    K = split(lin(key, params["wk"], params["bk"]))
    V = split(lin(value, params["wv"], params["bv"]))
    scores = jnp.einsum("bhqd,bhkd->bhqk", Q, K, precision=hp) / math.sqrt(d_k)
    attn = jax.nn.softmax(scores, axis=-1)
    ctx = jnp.einsum("bhqk,bhkd->bhqd", attn, V, precision=hp)
    ctx = jnp.transpose(ctx, (0, 2, 1, 3)).reshape(B, S, D)
    out = jnp.einsum("bsd,od->bso", ctx, params["wo"], precision=hp) + params["bo"]
    return out, attn


# ----------------------------------------------------------------------------
if __name__ == "__main__":
    def make_params(key, d_model):
        keys = jax.random.split(key, 8)
        bound = 1.0 / math.sqrt(d_model)

        def u(k, shape):
            return jax.random.uniform(k, shape, jnp.float32, -bound, bound)

        return {
            "wq": u(keys[0], (d_model, d_model)), "bq": u(keys[1], (d_model,)),
            "wk": u(keys[2], (d_model, d_model)), "bk": u(keys[3], (d_model,)),
            "wv": u(keys[4], (d_model, d_model)), "bv": u(keys[5], (d_model,)),
            "wo": u(keys[6], (d_model, d_model)), "bo": u(keys[7], (d_model,)),
        }

    root = jax.random.PRNGKey(0)
    k0, k1, k2, k3, k4 = jax.random.split(root, 5)

    # --- 1. cross-attention, small shapes, f32 MXU path ----------------------
    B, S, D, H = 2, 8, 32, 4
    params = make_params(k0, D)
    q = jax.random.normal(k1, (B, S, D), jnp.float32)
    k_in = jax.random.normal(k2, (B, S, D), jnp.float32)
    v_in = jax.random.normal(k3, (B, S, D), jnp.float32)

    out, attn = multi_head_attention(q, k_in, v_in, params, H,
                                     matmul_dtype=jnp.float32)
    jax.block_until_ready((out, attn))
    out_r, attn_r = reference(q, k_in, v_in, params, H)
    assert out.shape == (B, S, D) and attn.shape == (B, H, S, S)
    assert jnp.allclose(out, out_r, atol=2e-3, rtol=2e-3)
    assert jnp.allclose(attn, attn_r, atol=2e-3, rtol=2e-3)

    # --- 2. self-attention (fused QKV), small shapes, default bf16 path ------
    out2, attn2 = multi_head_attention(q, q, q, params, H)   # bf16 MXU default
    jax.block_until_ready((out2, attn2))
    out2_r, attn2_r = reference(q, q, q, params, H)
    assert jnp.allclose(out2, out2_r, atol=5e-2, rtol=5e-2)
    assert jnp.allclose(attn2, attn2_r, atol=5e-2, rtol=5e-2)

    # --- 3. self-attention at an (8,128)-aligned size, f32 path --------------
    B3, S3, D3, H3 = 2, 128, 256, 2
    k5, k6 = jax.random.split(k4, 2)
    params3 = make_params(k5, D3)
    x3 = jax.random.normal(k6, (B3, S3, D3), jnp.float32)
    out3, attn3 = multi_head_attention(x3, x3, x3, params3, H3,
                                       matmul_dtype=jnp.float32)
    jax.block_until_ready((out3, attn3))
    out3_r, attn3_r = reference(x3, x3, x3, params3, H3)
    assert out3.shape == (B3, S3, D3) and attn3.shape == (B3, H3, S3, S3)
    assert jnp.allclose(out3, out3_r, atol=2e-3, rtol=2e-3)
    assert jnp.allclose(attn3, attn3_r, atol=2e-3, rtol=2e-3)

    print("KERNEL_OK")
</pallas_src>

<mosaic_0001>
module attributes {stable_mosaic.version = 11 : i64} {
  func.func @_linear_kernel(%arg0: i32, %arg1: i32, %arg2: i32, %arg3: memref<16x32xf32, #tpu.memory_space<vmem>>, %arg4: memref<32x32xf32, #tpu.memory_space<vmem>>, %arg5: memref<1x32xf32, #tpu.memory_space<vmem>>, %arg6: memref<16x32xf32, #tpu.memory_space<vmem>>, %arg7: memref<16x32xf32, #tpu.memory_space<vmem>>) attributes {dimension_semantics = [#tpu.dimension_semantics<parallel>, #tpu.dimension_semantics<parallel>, #tpu.dimension_semantics<arbitrary>], iteration_bounds = array<i64: 1, 1, 1>, scalar_prefetch = 0 : i64, scratch_operands = 1 : i64, tpu.core_type = #tpu.core_type<tc>, window_params = [{transform_indices = @transform_0, window_bounds = array<i64: 16, 32>}, {transform_indices = @transform_1, window_bounds = array<i64: 32, 32>}, {transform_indices = @transform_2, window_bounds = array<i64: 1, 32>}, {transform_indices = @transform_3, window_bounds = array<i64: 16, 32>}]} {
    %c0_i32 = arith.constant 0 : i32
    %0 = arith.cmpi eq, %arg2, %c0_i32 : i32
    %1 = arith.extui %0 : i1 to i32
    %c0_i32_0 = arith.constant 0 : i32
    %2 = arith.cmpi ne, %1, %c0_i32_0 : i32
    scf.if %2 {
      %cst_10 = arith.constant 0.000000e+00 : f32
      %12 = vector.broadcast %cst_10 : f32 to vector<16x32xf32>
      %c0_11 = arith.constant 0 : index
      %c0_12 = arith.constant 0 : index
      %13 = vector.load %arg7[%c0_11, %c0_12] : memref<16x32xf32, #tpu.memory_space<vmem>>, vector<16x32xf32>
      tpu.vector_store %arg7[%c0_11, %c0_12], %12 {strides = array<i32>} : memref<16x32xf32, #tpu.memory_space<vmem>>, vector<16x32xf32>,
    } else {
    }
    %c0 = arith.constant 0 : index
    %c0_1 = arith.constant 0 : index
    %3 = vector.load %arg3[%c0, %c0_1] : memref<16x32xf32, #tpu.memory_space<vmem>>, vector<16x32xf32>
    %c0_2 = arith.constant 0 : index
    %c0_3 = arith.constant 0 : index
    %4 = vector.load %arg7[%c0_2, %c0_3] : memref<16x32xf32, #tpu.memory_space<vmem>>, vector<16x32xf32>
    %c0_4 = arith.constant 0 : index
    %c0_5 = arith.constant 0 : index
    %5 = vector.load %arg4[%c0_4, %c0_5] : memref<32x32xf32, #tpu.memory_space<vmem>>, vector<32x32xf32>
    %cst = arith.constant dense<0.000000e+00> : vector<16x32xf32>
    %6 = tpu.matmul %3, %5, %cst {dimension_numbers = #tpu.dot_dimension_numbers<[1], [1], [0], [0], [0, 0, 1, 0], [], []>} : vector<16x32xf32>, vector<32x32xf32>, vector<16x32xf32> -> vector<16x32xf32>
    %7 = arith.addf %4, %6 : vector<16x32xf32>
    %c0_6 = arith.constant 0 : index
    %c0_7 = arith.constant 0 : index
    %8 = vector.load %arg7[%c0_6, %c0_7] : memref<16x32xf32, #tpu.memory_space<vmem>>, vector<16x32xf32>
    tpu.vector_store %arg7[%c0_6, %c0_7], %7 {strides = array<i32>} : memref<16x32xf32, #tpu.memory_space<vmem>>, vector<16x32xf32>,
    %c0_i32_8 = arith.constant 0 : i32
    %9 = arith.cmpi eq, %arg2, %c0_i32_8 : i32
    %10 = arith.extui %9 : i1 to i32
    %c0_i32_9 = arith.constant 0 : i32
    %11 = arith.cmpi ne, %10, %c0_i32_9 : i32
    scf.if %11 {
      %c0_10 = arith.constant 0 : index
      %c0_11 = arith.constant 0 : index
      %12 = vector.load %arg7[%c0_10, %c0_11] : memref<16x32xf32, #tpu.memory_space<vmem>>, vector<16x32xf32>
      %c0_12 = arith.constant 0 : index
      %c0_13 = arith.constant 0 : index
      %13 = vector.load %arg5[%c0_12, %c0_13] : memref<1x32xf32, #tpu.memory_space<vmem>>, vector<1x32xf32>
      %14 = vector.broadcast %13 : vector<1x32xf32> to vector<16x32xf32>
      %15 = arith.addf %12, %14 : vector<16x32xf32>
      %c0_14 = arith.constant 0 : index
      %c0_15 = arith.constant 0 : index
      %16 = vector.load %arg6[%c0_14, %c0_15] : memref<16x32xf32, #tpu.memory_space<vmem>>, vector<16x32xf32>
      tpu.vector_store %arg6[%c0_14, %c0_15], %15 {strides = array<i32>} : memref<16x32xf32, #tpu.memory_space<vmem>>, vector<16x32xf32>,
    } else {
    }
    return
  }
  func.func @transform_0(%arg0: i32, %arg1: i32, %arg2: i32) -> (i32, i32) {
    %c0_i32 = arith.constant 0 : i32
    return %arg0, %arg2 : i32, i32
  }
  func.func @transform_1(%arg0: i32, %arg1: i32, %arg2: i32) -> (i32, i32) {
    %c0_i32 = arith.constant 0 : i32
    return %arg1, %arg2 : i32, i32
  }
  func.func @transform_2(%arg0: i32, %arg1: i32, %arg2: i32) -> (i32, i32) {
    %c0_i32 = arith.constant 0 : i32
    %c0_i32_0 = arith.constant 0 : i32
    return %c0_i32, %arg1 : i32, i32
  }
  func.func @transform_3(%arg0: i32, %arg1: i32, %arg2: i32) -> (i32, i32) {
    %c0_i32 = arith.constant 0 : i32
    return %arg0, %arg1 : i32, i32
  }
}

</mosaic_0001>

<llo_original>
// kernel: tpu_custom_call.1
$region0: #{tpu_custom_call.1}
  #allocation0 [shape = 'u32[]', space=smem, size = 0x4, offset = 0x4, fixed_abs, tag = 'smem constant byte address 0x4 - core index']
  #allocation1 [shape = 'u32[72,128]{1,0:T(1,128)}', space=vmem, size = 0x9000, scoped, tag = 'internal scratch']
  #allocation2 [shape = 'f32[16,32]{1,0:T(8,128)}', space=vmem, size = 0x2000, scoped, tag = 'scratch operand']
  %s0 = inlined_call_operand.hbm [shape: f32[16,32], index: 0, kind: input, shape index: {}]
  %s1 = inlined_call_operand.hbm [shape: f32[32,32], index: 1, kind: input, shape index: {}]
  %s2 = inlined_call_operand.vmem [shape: f32[1,32], index: 2, kind: input, shape index: {}]
  %s3 = inlined_call_operand.hbm [shape: f32[16,32], index: 3, kind: output, shape index: {}]
  %s4 = sld [smem:[#allocation0]]
  $region38: #{tpu_custom_call.1} parent=0
    _
  %s6 = ssub.s32 1, %s4
  %s7 = scalar_select 0, %s6, %s4
  $region1: #{tpu_custom_call.1} parent=0
    #allocation3 [shape = 'u8[8192]{0}', space=vmem, size = 0x2000, scoped, tag = 'input window, operand 0, single buffered']
    #allocation4 [shape = 's32[1]{0}', space=sflag, size = 0x4, scoped, tag = 'scoped memory for tpu_custom_call.1']
    #allocation5 [shape = 's32[1]{0}', space=sflag, size = 0x4, scoped, tag = 'scoped memory for tpu_custom_call.1']
    #allocation6 [shape = 'u8[16384]{0}', space=vmem, size = 0x4000, scoped, tag = 'input window, operand 1, single buffered']
    #allocation7 [shape = 's32[1]{0}', space=sflag, size = 0x4, scoped, tag = 'scoped memory for tpu_custom_call.1']
    #allocation8 [shape = 'u8[8192]{0}', space=vmem, size = 0x2000, scoped, tag = 'output window, operand 0, single buffered']
    %8 = vsyncpa [#allocation4], 0
    %9 = vsyncpa [#allocation7], 0
    %10 = vsyncpa [#allocation5], 0
    // Predicated region
    $region2: #{tpu_custom_call.1} parent=1 // pred_check
      _
    $region3: #{tpu_custom_call.1} parent=1 // pred_check_branch
      %12 = sbr.rel (0) target = $region5
    $region4: #{tpu_custom_call.1} parent=1 // pred_region
      %14 = vsyncadd [#allocation4], 0
      %s15 = sshll.u32 %s0, 4
      %s16 = int_to_ptr.hbm [resolvable:$true] %s15
      %s17 = sshll.u32 [#allocation3], 4
      %s18 = int_to_ptr.vmem [resolvable:$true] %s17
      %23 = dma.hbm_to_vmem [thread:$0]  %s16, 256, %s18, [#allocation4], 128, 128, 8
    $region5: #{tpu_custom_call.1} parent=1 // pred_fallthru
      _
    // Predicated region
    $region6: #{tpu_custom_call.1} parent=1 // pred_check
      _
    $region7: #{tpu_custom_call.1} parent=1 // pred_check_branch
      %25 = sbr.rel (0) target = $region9
    $region8: #{tpu_custom_call.1} parent=1 // pred_region
      %27 = vsyncadd [#allocation7], 0
      %s28 = sshll.u32 %s1, 4
      %s29 = int_to_ptr.hbm [resolvable:$true] %s28
      %s30 = sshll.u32 [#allocation6], 4
      %s31 = int_to_ptr.vmem [resolvable:$true] %s30
      %36 = dma.hbm_to_vmem [thread:$0]  %s29, 512, %s31, [#allocation7], 128, 128, 8
    $region9: #{tpu_custom_call.1} parent=1 // pred_fallthru
      _
    // Predicated region
    $region10: #{tpu_custom_call.1} parent=1 // pred_check
      _
    $region11: #{tpu_custom_call.1} parent=1 // pred_check_branch
      %38 = sbr.rel (0) target = $region13
    $region12: #{tpu_custom_call.1} parent=1 // pred_region
      _
    $region13: #{tpu_custom_call.1} parent=1 // pred_fallthru
      _
    // Predicated region
    $region14: #{tpu_custom_call.1} parent=1 // pred_check
      _
    $region15: #{tpu_custom_call.1} parent=1 // pred_check_branch
      %40 = sbr.rel (0) target = $region17
    $region16: #{tpu_custom_call.1} parent=1 // pred_region
      %42 = dma.done [#allocation4], 256
    $region17: #{tpu_custom_call.1} parent=1 // pred_fallthru
      _
    // Predicated region
    $region18: #{tpu_custom_call.1} parent=1 // pred_check
      _
    $region19: #{tpu_custom_call.1} parent=1 // pred_check_branch
      %44 = sbr.rel (0) target = $region21
    $region20: #{tpu_custom_call.1} parent=1 // pred_region
      %46 = dma.done [#allocation7], 512
    $region21: #{tpu_custom_call.1} parent=1 // pred_fallthru
      _
    %p47 = scmp.eq.s32.totalorder 0, 0
    // Predicated region
    $region22: #{tpu_custom_call.1} parent=1 // pred_check
      %p48 = pneg %p47
    $region23: #{tpu_custom_call.1} parent=1 // pred_check_branch
      %50 = sbr.rel (%p48) target = $region25
    $region24: #{tpu_custom_call.1} parent=1 // pred_region
      %vm51 = vcmask 261120
      %52 = vst.msk [vmem:[#allocation2] sm:$0xff] %vm51, 0.0
      %53 = vst.msk [vmem:[#allocation2 + $0x8] sm:$0xff] %vm51, 0.0
    $region25: #{tpu_custom_call.1} parent=1 // pred_fallthru
      _
    %v54 = vld [vmem:[#allocation3] sm:$0xff]
    %v55 = vld [vmem:[#allocation3 + $0x8] sm:$0xff]
    %v56 = vld [vmem:[#allocation2] sm:$0xff]
    %v57 = vld [vmem:[#allocation2 + $0x8] sm:$0xff]
    %v58 = vld [vmem:[#allocation6] sm:$0xff]
    %v59 = vld [vmem:[#allocation6 + $0x8] sm:$0xff]
    %v60 = vld [vmem:[#allocation6 + $0x10] sm:$0xff]
    %v61 = vld [vmem:[#allocation6 + $0x18] sm:$0xff]
    %vm62 = vcmask 261120
    %v64 = vsel %vm62, %v54, 0
    %v67 = vsel %vm62, %v55, 0
    %v70 = vsel %vm62, %v58, 0
    %v73 = vsel %vm62, %v59, 0
    %v76 = vsel %vm62, %v60, 0
    %v79 = vsel %vm62, %v61, 0
    %81 = vmatpush.xpose.msra.mxu0 0.0
    %82 = vmatpush.xpose.msra.mxu0 0.0
    %83 = vmatpush.xpose.msra.mxu0 0.0
    %84 = vmatpush.xpose.msra.mxu0 0.0
    %85 = vmatpush.xpose.msra.mxu0 0.0
    %86 = vmatpush.xpose.msra.mxu0 0.0
    %87 = vmatpush.xpose.msra.mxu0 0.0
    %88 = vmatpush.xpose.msra.mxu0 0.0
    %89 = vmatpush.xpose.msra.mxu0 0.0
    %90 = vmatpush.xpose.msra.mxu0 0.0
    %91 = vmatpush.xpose.msra.mxu0 0.0
    %92 = vmatpush.xpose.msra.mxu0 0.0
    %93 = vmatpush.xpose.msra.mxu0 %v79
    %94 = vmatpush.xpose.msra.mxu0 %v76
    %95 = vmatpush.xpose.msra.mxu0 %v73
    %96 = vmatpush.xpose.msra.mxu0 %v70
    %97 = vmatmul.f32.gmra.mxu0 %v64
    %v98 = vpop.f32.mrf.mxu0
    %v99 = vadd.f32 0.0, %v98
    %100 = vmatmul.f32.gmra.mxu0 %v67
    %v101 = vpop.f32.mrf.mxu0
    %v102 = vadd.f32 0.0, %v101
    %103 = vdwg.mxu0
    %v104 = vadd.f32 %v56, %v99
    %v105 = vadd.f32 %v57, %v102
    %106 = vst.msk [vmem:[#allocation2] sm:$0xff] %vm62, %v104
    %107 = vst.msk [vmem:[#allocation2 + $0x8] sm:$0xff] %vm62, %v105
    // Predicated region
    $region26: #{tpu_custom_call.1} parent=1 // pred_check
      %p108 = pneg %p47
    $region27: #{tpu_custom_call.1} parent=1 // pred_check_branch
      %110 = sbr.rel (%p108) target = $region29
    $region28: #{tpu_custom_call.1} parent=1 // pred_region
      %v111 = vld [vmem:[#allocation2] sm:$0xff]
      %v112 = vld [vmem:[#allocation2 + $0x8] sm:$0xff]
      %v113 = vld [vmem:[%s2] sm:$0x1]
      %v115 = vperm.slane %v113, 0
      %v117 = vadd.f32 %v111, %v115
      %v118 = vadd.f32 %v112, %v115
      %119 = vst.msk [vmem:[#allocation8] sm:$0xff] %vm62, %v117
      %120 = vst.msk [vmem:[#allocation8 + $0x8] sm:$0xff] %vm62, %v118
    $region29: #{tpu_custom_call.1} parent=1 // pred_fallthru
      _
    // Predicated region
    $region30: #{tpu_custom_call.1} parent=1 // pred_check
      _
    $region31: #{tpu_custom_call.1} parent=1 // pred_check_branch
      %122 = sbr.rel (0) target = $region33
    $region32: #{tpu_custom_call.1} parent=1 // pred_region
      %124 = vsyncadd [#allocation5], 0
      %s125 = sshll.u32 [#allocation8], 4
      %s126 = int_to_ptr.vmem [resolvable:$true] %s125
      %s127 = sshll.u32 %s3, 4
      %s128 = int_to_ptr.hbm [resolvable:$true] %s127
      %133 = dma.vmem_to_hbm [thread:$0]  %s126, 256, %s128, [#allocation5], 128, 128, 8
    $region33: #{tpu_custom_call.1} parent=1 // pred_fallthru
      _
    // Predicated region
    $region34: #{tpu_custom_call.1} parent=1 // pred_check
      _
    $region35: #{tpu_custom_call.1} parent=1 // pred_check_branch
      %135 = sbr.rel (0) target = $region37
    $region36: #{tpu_custom_call.1} parent=1 // pred_region
      %137 = dma.done [#allocation5], 256
    $region37: #{tpu_custom_call.1} parent=1 // pred_fallthru
      _
    %138 = vsyncpa [#allocation4], 1
    %139 = vsyncpa [#allocation7], 1
    %140 = vsyncpa [#allocation5], 1

</llo_original>
